<compile_context>
chip_gen: v6e
topology: v6e:2x2x1
jax: 0.10.0
libtpu: 0.0.40
codegen_flags: <defaults>
</compile_context>

<pallas_src>
import functools

import jax
import jax.numpy as jnp
from jax import lax
from jax.experimental import pallas as pl
from jax.experimental.pallas import tpu as pltpu

LANES = 128                  # vreg lane width (last-dim tile)
ACC_ROWS = 256               # fixed (256,128) f32 accumulator = 128 KiB VMEM
TARGET_STEP_BYTES = 8 << 20  # combined x+y bytes streamed per grid step (~4 MiB/input f32)
MAX_TILE_ROWS = 16384        # hard cap on rows per tile (narrow-dtype inputs)


def _detect_num_tensorcores():
    """Best-effort TensorCore count: v7x has 2 per chip, v5e/v6e have 1."""
    try:
        kind = (jax.devices()[0].device_kind or "").lower().replace(" ", "")
    except Exception:
        return 1
    return 2 if ("v7" in kind or "tpu7" in kind) else 1


def _int_pow(b, n):
    r = b
    for _ in range(n - 1):
        r = r * b
    return r


def _modulating_factor(base, gamma):
    """(1 - pt) ** gamma with EUP-friendly specializations.

    gamma == 0 / 1 / small int -> multiplies only
    gamma == k + 0.5           -> sqrt * integer power (no exp/log)
    otherwise                  -> jnp.power (exp/log on the EUP)
    Fractional exponents clamp the base at 0 (insurance against -1e-8 rounding).
    """
    g = float(gamma)
    if g == 0.0:
        return jnp.ones_like(base)
    if g.is_integer() and 1.0 <= g <= 8.0:
        return _int_pow(base, int(g))
    if (2.0 * g).is_integer() and 0.0 < g <= 8.5:
        base = jnp.maximum(base, 0.0)
        s = jnp.sqrt(base)
        k = int(g)                       # g = k + 0.5
        return s if k == 0 else s * _int_pow(base, k)
    return jnp.power(jnp.maximum(base, 0.0), g)


def _focal_elements(x, y, gamma, binary_targets):
    """Per-element focal loss on float32 inputs (any shape).

    Matches torch: bce = BCE_with_logits(x, y); pt = exp(-bce);
    loss = (1 - pt)**gamma * bce, using the numerically stable bce form.
    """
    e = jnp.exp(-jnp.abs(x))
    bce = jnp.maximum(x, 0.0) - x * y + jnp.log1p(e)
    if binary_targets:
        # With hard {0,1} targets: pt = p if y==1 else 1-p, p = sigmoid(x).
        # Algebraically identical to exp(-bce) but saves the second exp (EUP).
        pt = jnp.where((y > 0.5) == (x > 0.0), 1.0, e) / (1.0 + e)
    else:
        pt = jnp.exp(-bce)
    return _modulating_factor(1.0 - pt, gamma) * bce


def _focal_loss_kernel(x_ref, y_ref, out_ref, acc_ref, *, gamma, binary_targets,
                       acc_rows, fold_k, tile_rows, total_rows, tiles_per_core,
                       needs_mask, split):
    if split:
        c = pl.program_id(0)             # core-split axis ("parallel", v7x)
        j = pl.program_id(1)             # reduction axis ("arbitrary")
        nj = pl.num_programs(1)
    else:
        c = 0
        j = pl.program_id(0)
        nj = pl.num_programs(0)

    @pl.when(j == 0)
    def _():
        acc_ref[...] = jnp.zeros_like(acc_ref)

    if needs_mask:
        # Only ragged-last / phantom tiles need masking: one compare + select per
        # element (where-SELECT, so NaNs from OOB garbage cannot propagate).
        g_idx = c * tiles_per_core + j if split else j
        valid_rows = total_rows - g_idx * tile_rows   # <= 0 on phantom tiles
        row_id = lax.broadcasted_iota(jnp.int32, (acc_rows, LANES), 0)

    # Fold the tile into the small fixed accumulator in acc_rows-sized chunks:
    # elementwise temporaries stay (acc_rows, 128)-sized and the accumulator
    # VMEM traffic stays small, so the input DMA is the only large stream.
    for i in range(fold_k):
        lo = i * acc_rows
        if fold_k == 1:
            xs = x_ref[...].astype(jnp.float32)
            ys = y_ref[...].astype(jnp.float32)
        else:
            xs = x_ref[lo:lo + acc_rows, :].astype(jnp.float32)
            ys = y_ref[lo:lo + acc_rows, :].astype(jnp.float32)
        l = _focal_elements(xs, ys, gamma, binary_targets)
        if needs_mask:
            l = jnp.where(row_id < (valid_rows - lo), l, 0.0)
        acc_ref[...] += l

    @pl.when(j == nj - 1)
    def _():
        s = jnp.sum(acc_ref[...])
        out_ref[...] = jnp.broadcast_to(s, out_ref.shape)


def focal_loss(x, y, gamma=1.0, logits=True, binary_targets=False, *,
               max_tile_rows=None, acc_rows=None):
    """Pallas implementation of FocalLoss.forward (returns the scalar mean loss).

    The reference module with logits=False applies sigmoid(x) itself and then BCE
    on the probabilities, which is mathematically identical to BCE-with-logits on
    x, so both settings use the same (more stable) logits formulation here.
    Set binary_targets=True when y is hard {0,1} to skip one exp per element.
    """
    del logits
    assert x.shape == y.shape, (x.shape, y.shape)
    total = int(x.size)
    gamma = float(gamma)

    xf = x.reshape(-1)
    yf = y.reshape(-1)
    rows = total // LANES
    main = rows * LANES

    tail_sum = jnp.float32(0.0)
    if main != total:
        # <128-element ragged tail: computed in plain XLA instead of padding and
        # copying the whole array just to lane-align it.
        tail_sum = jnp.sum(_focal_elements(xf[main:].astype(jnp.float32),
                                           yf[main:].astype(jnp.float32),
                                           gamma, binary_targets))
    if rows == 0:
        return tail_sum / jnp.float32(total)

    x2d = (xf if main == total else xf[:main]).reshape(rows, LANES)
    y2d = (yf if main == total else yf[:main]).reshape(rows, LANES)

    isz_x = jnp.dtype(x.dtype).itemsize
    isz_y = jnp.dtype(y.dtype).itemsize
    # Sublane packing of the narrowest input dtype (f32->8, bf16->16, int8->32).
    sub = 8 * max(1, 4 // max(1, min(isz_x, isz_y)))

    acc_cap = ACC_ROWS if acc_rows is None else max(1, int(acc_rows))
    budget_rows = TARGET_STEP_BYTES // (LANES * (isz_x + isz_y))
    if max_tile_rows is not None:
        budget_rows = min(budget_rows, int(max_tile_rows))
    budget_rows = max(1, min(budget_rows, MAX_TILE_ROWS))

    if rows <= acc_cap:
        tile_rows = rows                  # single full-dim tile: always layout-legal
        acc_rows_eff = rows
    else:
        acc_rows_eff = max(sub, (acc_cap // sub) * sub)
        tile_rows = max(acc_rows_eff,
                        (min(budget_rows, rows) // acc_rows_eff) * acc_rows_eff)
    fold_k = tile_rows // acc_rows_eff

    n_tiles = -(-rows // tile_rows)                         # cdiv
    n_cores = _detect_num_tensorcores() if n_tiles >= 2 else 1
    split = n_cores > 1
    tiles_per_core = -(-n_tiles // n_cores)                 # cdiv
    phantoms = split and n_cores * tiles_per_core > n_tiles
    ragged_last = rows != n_tiles * tile_rows
    needs_mask = ragged_last or phantoms

    if split:
        grid = (n_cores, tiles_per_core)
        if phantoms:
            in_map = lambda c, j: (jnp.minimum(c * tiles_per_core + j, n_tiles - 1), 0)
        else:
            in_map = lambda c, j: (c * tiles_per_core + j, 0)
        out_map = lambda c, j: (c, 0, 0)
        # "parallel" shards the leading axis across TensorCores on multi-core
        # chips; if xprof ever shows a v7x core idle, switch to pltpu.CORE_PARALLEL.
        dims = ("parallel", "arbitrary")
    else:
        grid = (n_tiles,)
        in_map = lambda j: (j, 0)
        out_map = lambda j: (0, 0, 0)
        dims = ("arbitrary",)

    kernel = functools.partial(
        _focal_loss_kernel, gamma=gamma, binary_targets=binary_targets,
        acc_rows=acc_rows_eff, fold_k=fold_k, tile_rows=tile_rows,
        total_rows=rows, tiles_per_core=tiles_per_core,
        needs_mask=needs_mask, split=split)

    # Explicit VMEM budget: 2 double-buffered input tiles + accumulator + headroom.
    step_in_bytes = tile_rows * LANES * (isz_x + isz_y)
    vmem_need = 2 * step_in_bytes + acc_rows_eff * LANES * 4 + 2 * 8 * LANES * 4
    vmem_limit = int(min(max(vmem_need * 5 // 4 + (2 << 20), 16 << 20), 48 << 20))

    cost = pl.CostEstimate(
        flops=12 * main,
        transcendentals=(2 if binary_targets else 3) * main,
        bytes_accessed=main * (isz_x + isz_y) + n_cores * 8 * LANES * 4)

    partials = pl.pallas_call(
        kernel,
        out_shape=jax.ShapeDtypeStruct((n_cores, 8, LANES), jnp.float32),
        grid_spec=pltpu.PrefetchScalarGridSpec(
            num_scalar_prefetch=0,
            grid=grid,
            in_specs=[pl.BlockSpec((tile_rows, LANES), in_map),
                      pl.BlockSpec((tile_rows, LANES), in_map)],
            out_specs=pl.BlockSpec((1, 8, LANES), out_map),
            scratch_shapes=[pltpu.VMEM((acc_rows_eff, LANES), jnp.float32)],
        ),
        compiler_params=pltpu.CompilerParams(
            dimension_semantics=dims, vmem_limit_bytes=vmem_limit),
        cost_estimate=cost,
    )(x2d, y2d)

    # Per-core partial sums live at [:, 0, 0]; final tiny reduce + mean in XLA.
    return (jnp.sum(partials[:, 0, 0]) + tail_sum) / jnp.float32(total)


def _reference(x, y, gamma=1.0):
    x = x.astype(jnp.float32)
    y = y.astype(jnp.float32)
    bce = jnp.maximum(x, 0.0) - x * y + jnp.log1p(jnp.exp(-jnp.abs(x)))
    pt = jnp.exp(-bce)
    return jnp.mean(jnp.power(1.0 - pt, gamma) * bce)


if __name__ == "__main__":
    key = jax.random.PRNGKey(0)
    keys = jax.random.split(key, 8)

    def check(out, ref, name):
        assert jnp.allclose(out, ref, atol=1e-5, rtol=1e-4), (name, out, ref)

    # 1) Module defaults (gamma=1.0, logits=True) on NCHW logits / binary targets.
    x = jax.random.normal(keys[0], (2, 4, 16, 16), dtype=jnp.float32)
    y = (jax.random.uniform(keys[1], (2, 4, 16, 16)) > 0.5).astype(jnp.float32)
    out = jax.block_until_ready(focal_loss(x, y, gamma=1.0, logits=True))
    check(out, _reference(x, y, 1.0), "default")

    # 1b) Same inputs, chunked accumulator fold path (fold_k > 1).
    out1b = jax.block_until_ready(focal_loss(x, y, gamma=1.0, acc_rows=8))
    check(out1b, _reference(x, y, 1.0), "chunked-fold")

    # 2) Multi-tile + ragged last tile + chunked fold + integer gamma.
    x2 = jax.random.normal(keys[2], (2, 4, 17, 16), dtype=jnp.float32)
    y2 = (jax.random.uniform(keys[3], (2, 4, 17, 16)) > 0.5).astype(jnp.float32)
    out2 = jax.block_until_ready(
        focal_loss(x2, y2, gamma=2.0, max_tile_rows=16, acc_rows=8))
    check(out2, _reference(x2, y2, 2.0), "ragged-tiles")

    # 3) gamma = 0.5 (sqrt specialization, no jnp.power).
    out3 = jax.block_until_ready(focal_loss(x, y, gamma=0.5))
    check(out3, _reference(x, y, 0.5), "gamma-0.5")

    # 4) Element count not a multiple of 128 -> XLA tail path; soft targets; gamma=1.5.
    x4 = jax.random.normal(keys[4], (2, 4, 9, 13), dtype=jnp.float32)
    y4 = jax.random.uniform(keys[5], (2, 4, 9, 13))
    out4 = jax.block_until_ready(focal_loss(x4, y4, gamma=1.5))
    check(out4, _reference(x4, y4, 1.5), "lane-tail")

    # 5) bf16 logits + int8 hard targets + binary_targets fast path (fewer EUP ops).
    x5 = jax.random.normal(keys[6], (2, 4, 16, 16),
                           dtype=jnp.float32).astype(jnp.bfloat16)
    y5 = (jax.random.uniform(keys[7], (2, 4, 16, 16)) > 0.5).astype(jnp.int8)
    out5 = jax.block_until_ready(focal_loss(x5, y5, gamma=2.0, binary_targets=True))
    check(out5, _reference(x5.astype(jnp.float32), y5.astype(jnp.float32), 2.0),
          "bf16-int8-binary")

    print("KERNEL_OK")
</pallas_src>

<mosaic_0001>
module attributes {stable_mosaic.version = 11 : i64} {
  func.func @_focal_loss_kernel(%arg0: i32, %arg1: memref<16x128xf32, #tpu.memory_space<vmem>>, %arg2: memref<16x128xf32, #tpu.memory_space<vmem>>, %arg3: memref<1x8x128xf32, #tpu.memory_space<vmem>>, %arg4: memref<16x128xf32, #tpu.memory_space<vmem>>) attributes {dimension_semantics = [#tpu.dimension_semantics<arbitrary>], iteration_bounds = array<i64: 1>, scalar_prefetch = 0 : i64, scratch_operands = 1 : i64, tpu.core_type = #tpu.core_type<tc>, window_params = [{transform_indices = @transform_0, window_bounds = array<i64: 16, 128>}, {transform_indices = @transform_1, window_bounds = array<i64: 16, 128>}, {pipeline_mode = #tpu.pipeline_mode<synchronous>, transform_indices = @transform_2, window_bounds = array<i64: 1, 8, 128>}]} {
    %c0_i32 = arith.constant 0 : i32
    %0 = arith.cmpi eq, %arg0, %c0_i32 : i32
    %1 = arith.extui %0 : i1 to i32
    %c0_i32_0 = arith.constant 0 : i32
    %2 = arith.cmpi ne, %1, %c0_i32_0 : i32
    scf.if %2 {
      %cst_13 = arith.constant 0.000000e+00 : f32
      %27 = vector.broadcast %cst_13 : f32 to vector<16x128xf32>
      %c0_14 = arith.constant 0 : index
      %c0_15 = arith.constant 0 : index
      %28 = vector.load %arg4[%c0_14, %c0_15] : memref<16x128xf32, #tpu.memory_space<vmem>>, vector<16x128xf32>
      tpu.vector_store %arg4[%c0_14, %c0_15], %27 {strides = array<i32>} : memref<16x128xf32, #tpu.memory_space<vmem>>, vector<16x128xf32>,
    } else {
    }
    %c0 = arith.constant 0 : index
    %c0_1 = arith.constant 0 : index
    %3 = vector.load %arg1[%c0, %c0_1] : memref<16x128xf32, #tpu.memory_space<vmem>>, vector<16x128xf32>
    %c0_2 = arith.constant 0 : index
    %c0_3 = arith.constant 0 : index
    %4 = vector.load %arg2[%c0_2, %c0_3] : memref<16x128xf32, #tpu.memory_space<vmem>>, vector<16x128xf32>
    %5 = math.absf %3 : vector<16x128xf32>
    %cst = arith.constant 0.000000e+00 : f32
    %6 = vector.broadcast %cst : f32 to vector<16x128xf32>
    %7 = arith.subf %6, %5 : vector<16x128xf32>
    %8 = math.exp %7 : vector<16x128xf32>
    %cst_4 = arith.constant 0.000000e+00 : f32
    %9 = vector.broadcast %cst_4 : f32 to vector<16x128xf32>
    %10 = arith.maximumf %3, %9 : vector<16x128xf32>
    %11 = arith.mulf %3, %4 : vector<16x128xf32>
    %12 = arith.subf %10, %11 : vector<16x128xf32>
    %13 = math.log1p %8 : vector<16x128xf32>
    %14 = arith.addf %12, %13 : vector<16x128xf32>
    %cst_5 = arith.constant 0.000000e+00 : f32
    %15 = vector.broadcast %cst_5 : f32 to vector<16x128xf32>
    %16 = arith.subf %15, %14 : vector<16x128xf32>
    %17 = math.exp %16 : vector<16x128xf32>
    %cst_6 = arith.constant 1.000000e+00 : f32
    %18 = vector.broadcast %cst_6 : f32 to vector<16x128xf32>
    %19 = arith.subf %18, %17 : vector<16x128xf32>
    %20 = arith.mulf %19, %14 : vector<16x128xf32>
    %c0_7 = arith.constant 0 : index
    %c0_8 = arith.constant 0 : index
    %21 = vector.load %arg4[%c0_7, %c0_8] : memref<16x128xf32, #tpu.memory_space<vmem>>, vector<16x128xf32>
    %22 = arith.addf %21, %20 : vector<16x128xf32>
    %c0_9 = arith.constant 0 : index
    %c0_10 = arith.constant 0 : index
    %23 = vector.load %arg4[%c0_9, %c0_10] : memref<16x128xf32, #tpu.memory_space<vmem>>, vector<16x128xf32>
    tpu.vector_store %arg4[%c0_9, %c0_10], %22 {strides = array<i32>} : memref<16x128xf32, #tpu.memory_space<vmem>>, vector<16x128xf32>,
    %c0_i32_11 = arith.constant 0 : i32
    %24 = arith.cmpi eq, %arg0, %c0_i32_11 : i32
    %25 = arith.extui %24 : i1 to i32
    %c0_i32_12 = arith.constant 0 : i32
    %26 = arith.cmpi ne, %25, %c0_i32_12 : i32
    scf.if %26 {
      %c0_13 = arith.constant 0 : index
      %c0_14 = arith.constant 0 : index
      %27 = vector.load %arg4[%c0_13, %c0_14] : memref<16x128xf32, #tpu.memory_space<vmem>>, vector<16x128xf32>
      %28 = vector.shape_cast %27 : vector<16x128xf32> to vector<1x16x128xf32>
      %cst_15 = arith.constant dense<0.000000e+00> : vector<1xf32>
      %29 = vector.multi_reduction <add>, %28, %cst_15 [1, 2] : vector<1x16x128xf32> to vector<1xf32>
      %30 = vector.shape_cast %29 : vector<1xf32> to vector<1x1x1xf32>
      %31 = vector.extract %30[0, 0, 0] : f32 from vector<1x1x1xf32>
      %32 = vector.broadcast %31 : f32 to vector<1x8x128xf32>
      %c0_16 = arith.constant 0 : index
      %c0_17 = arith.constant 0 : index
      %c0_18 = arith.constant 0 : index
      %33 = vector.load %arg3[%c0_16, %c0_17, %c0_18] : memref<1x8x128xf32, #tpu.memory_space<vmem>>, vector<1x8x128xf32>
      tpu.vector_store %arg3[%c0_16, %c0_17, %c0_18], %32 {strides = array<i32>} : memref<1x8x128xf32, #tpu.memory_space<vmem>>, vector<1x8x128xf32>,
    } else {
    }
    return
  }
  func.func @transform_0(%arg0: i32) -> (i32, i32) {
    %c0_i32 = arith.constant 0 : i32
    %c0_i32_0 = arith.constant 0 : i32
    return %arg0, %c0_i32 : i32, i32
  }
  func.func @transform_1(%arg0: i32) -> (i32, i32) {
    %c0_i32 = arith.constant 0 : i32
    %c0_i32_0 = arith.constant 0 : i32
    return %arg0, %c0_i32 : i32, i32
  }
  func.func @transform_2(%arg0: i32) -> (i32, i32, i32) {
    %c0_i32 = arith.constant 0 : i32
    %c0_i32_0 = arith.constant 0 : i32
    %c0_i32_1 = arith.constant 0 : i32
    %c0_i32_2 = arith.constant 0 : i32
    return %c0_i32, %c0_i32_0, %c0_i32_1 : i32, i32, i32
  }
}

</mosaic_0001>

<llo_original>
// kernel: tpu_custom_call.1
$region0: #{tpu_custom_call.1}
  #allocation0 [shape = 'u32[]', space=smem, size = 0x4, offset = 0x4, fixed_abs, tag = 'smem constant byte address 0x4 - core index']
  #allocation1 [shape = 'u32[144,128]{1,0:T(1,128)}', space=vmem, size = 0x12000, scoped, tag = 'internal scratch']
  #allocation2 [shape = 'f32[16,128]{1,0:T(8,128)}', space=vmem, size = 0x2000, scoped, tag = 'scratch operand']
  %s0 = inlined_call_operand.hbm [shape: f32[16,128], index: 0, kind: input, shape index: {}]
  %s1 = inlined_call_operand.hbm [shape: f32[16,128], index: 1, kind: input, shape index: {}]
  %s2 = inlined_call_operand.hbm [shape: f32[1,8,128], index: 2, kind: output, shape index: {}]
  %s3 = sld [smem:[#allocation0]]
  $region34: #{tpu_custom_call.1} parent=0
    _
  %s5 = ssub.s32 1, %s3
  %s6 = scalar_select 0, %s5, %s3
  $region1: #{tpu_custom_call.1} parent=0
    #allocation3 [shape = 'u8[8192]{0}', space=vmem, size = 0x2000, scoped, tag = 'input window, operand 0, single buffered']
    #allocation4 [shape = 's32[1]{0}', space=sflag, size = 0x4, scoped, tag = 'scoped memory for tpu_custom_call.1']
    #allocation5 [shape = 's32[1]{0}', space=sflag, size = 0x4, scoped, tag = 'scoped memory for tpu_custom_call.1']
    #allocation6 [shape = 'u8[8192]{0}', space=vmem, size = 0x2000, scoped, tag = 'input window, operand 1, single buffered']
    #allocation7 [shape = 's32[1]{0}', space=sflag, size = 0x4, scoped, tag = 'scoped memory for tpu_custom_call.1']
    #allocation8 [shape = 'u8[4096]{0}', space=vmem, size = 0x1000, scoped, tag = 'output window, operand 0, single buffered']
    %7 = vsyncpa [#allocation4], 0
    %8 = vsyncpa [#allocation7], 0
    %9 = vsyncpa [#allocation5], 0
    // Predicated region
    $region2: #{tpu_custom_call.1} parent=1 // pred_check
      _
    $region3: #{tpu_custom_call.1} parent=1 // pred_check_branch
      %11 = sbr.rel (0) target = $region5
    $region4: #{tpu_custom_call.1} parent=1 // pred_region
      %s13 = ssub.s32 256, 256
      %14 = vsyncadd [#allocation4], %s13
      %s15 = sshll.u32 [#allocation3], 4
      %s16 = int_to_ptr.vmem [resolvable:$true] %s15
      %21 = dma.hbm_to_vmem [thread:$0]  %s0, 256, %s16, [#allocation4], 128, 128, 8
    $region5: #{tpu_custom_call.1} parent=1 // pred_fallthru
      _
    // Predicated region
    $region6: #{tpu_custom_call.1} parent=1 // pred_check
      _
    $region7: #{tpu_custom_call.1} parent=1 // pred_check_branch
      %23 = sbr.rel (0) target = $region9
    $region8: #{tpu_custom_call.1} parent=1 // pred_region
      %s25 = ssub.s32 256, 256
      %26 = vsyncadd [#allocation7], %s25
      %s27 = sshll.u32 [#allocation6], 4
      %s28 = int_to_ptr.vmem [resolvable:$true] %s27
      %33 = dma.hbm_to_vmem [thread:$0]  %s1, 256, %s28, [#allocation7], 128, 128, 8
    $region9: #{tpu_custom_call.1} parent=1 // pred_fallthru
      _
    // Predicated region
    $region10: #{tpu_custom_call.1} parent=1 // pred_check
      _
    $region11: #{tpu_custom_call.1} parent=1 // pred_check_branch
      %35 = sbr.rel (0) target = $region13
    $region12: #{tpu_custom_call.1} parent=1 // pred_region
      %36 = dma.done [#allocation4], 256
    $region13: #{tpu_custom_call.1} parent=1 // pred_fallthru
      _
    // Predicated region
    $region14: #{tpu_custom_call.1} parent=1 // pred_check
      _
    $region15: #{tpu_custom_call.1} parent=1 // pred_check_branch
      %38 = sbr.rel (0) target = $region17
    $region16: #{tpu_custom_call.1} parent=1 // pred_region
      %39 = dma.done [#allocation7], 256
    $region17: #{tpu_custom_call.1} parent=1 // pred_fallthru
      _
    %p40 = scmp.eq.s32.totalorder 0, 0
    // Predicated region
    $region18: #{tpu_custom_call.1} parent=1 // pred_check
      %p41 = pneg %p40
    $region19: #{tpu_custom_call.1} parent=1 // pred_check_branch
      %43 = sbr.rel (%p41) target = $region21
    $region20: #{tpu_custom_call.1} parent=1 // pred_region
      %44 = vst [vmem:[#allocation2] sm:$0xff] 0.0
      %45 = vst [vmem:[#allocation2 + $0x8] sm:$0xff] 0.0
    $region21: #{tpu_custom_call.1} parent=1 // pred_fallthru
      _
    %v46 = vld [vmem:[#allocation3] sm:$0xff]
    %v47 = vld [vmem:[#allocation3 + $0x8] sm:$0xff]
    %v48 = vld [vmem:[#allocation6] sm:$0xff]
    %v49 = vld [vmem:[#allocation6 + $0x8] sm:$0xff]
    %v50 = vand.u32 2147483647, %v46
    %v51 = vand.u32 2147483647, %v47
    %v52 = vsub.f32 0.0, %v50
    %v53 = vsub.f32 0.0, %v51
    %v54 = vmul.f32 %v52, 1.442695
    %v55 = vpow.pop %v54
    %v56 = vmul.f32 %v53, 1.442695
    %v57 = vpow.pop %v56
    %v58 = vmax.f32 %v46, 0.0
    %v59 = vmax.f32 %v47, 0.0
    %v60 = vmul.f32 %v46, %v48
    %v61 = vmul.f32 %v47, %v49
    %v62 = vsub.f32 %v58, %v60
    %v63 = vsub.f32 %v59, %v61
    %v64 = vadd.f32 %v55, 1.0
    %v65 = vlog2.pop %v64
    %v66 = vmul.f32 %v65, 0.6931472
    %v67 = vmul.f32 -0.5, %v55
    %v68 = vadd.f32 %v67, 1.0
    %v69 = vmul.f32 %v68, %v55
    %v70 = vand.u32 2147483647, %v55
    %vm71 = vcmp.lt.f32.partialorder %v70, 0.0004427343
    %v72 = vsel %vm71, %v69, %v66
    %v73 = vadd.f32 %v57, 1.0
    %v74 = vlog2.pop %v73
    %v75 = vmul.f32 %v74, 0.6931472
    %v76 = vmul.f32 -0.5, %v57
    %v77 = vadd.f32 %v76, 1.0
    %v78 = vmul.f32 %v77, %v57
    %v79 = vand.u32 2147483647, %v57
    %vm80 = vcmp.lt.f32.partialorder %v79, 0.0004427343
    %v81 = vsel %vm80, %v78, %v75
    %v82 = vadd.f32 %v62, %v72
    %v83 = vadd.f32 %v63, %v81
    %v84 = vsub.f32 0.0, %v82
    %v85 = vsub.f32 0.0, %v83
    %v86 = vmul.f32 %v84, 1.442695
    %v87 = vpow.pop %v86
    %v88 = vmul.f32 %v85, 1.442695
    %v89 = vpow.pop %v88
    %v90 = vsub.f32 1.0, %v87
    %v91 = vsub.f32 1.0, %v89
    %v92 = vmul.f32 %v90, %v82
    %v93 = vmul.f32 %v91, %v83
    %v94 = vld [vmem:[#allocation2] sm:$0xff]
    %v95 = vld [vmem:[#allocation2 + $0x8] sm:$0xff]
    %v96 = vadd.f32 %v94, %v92
    %v97 = vadd.f32 %v95, %v93
    %98 = vst [vmem:[#allocation2] sm:$0xff] %v96
    %99 = vst [vmem:[#allocation2 + $0x8] sm:$0xff] %v97
    // Predicated region
    $region22: #{tpu_custom_call.1} parent=1 // pred_check
      %p100 = pneg %p40
    $region23: #{tpu_custom_call.1} parent=1 // pred_check_branch
      %102 = sbr.rel (%p100) target = $region25
    $region24: #{tpu_custom_call.1} parent=1 // pred_region
      %v103 = vld [vmem:[#allocation2] sm:$0xff]
      %v104 = vld [vmem:[#allocation2 + $0x8] sm:$0xff]
      %v105 = vadd.f32 %v103, %v104
      %106 = vadd.xlane.f32.xlu0 %v105
      %v107 = vpop.xlane.xlu0 %106
      %v108 = vrot.slane %v107, 4
      %v109 = vadd.f32 %v107, %v108
      %v110 = vrot.slane %v109, 2
      %v111 = vadd.f32 %v109, %v110
      %v112 = vrot.slane %v111, 1
      %v113 = vadd.f32 %v111, %v112
      %s114 = vtos %v113
      %v115 = vstv %s114
      %116 = vst [vmem:[#allocation8] sm:$0xff] %v115
    $region25: #{tpu_custom_call.1} parent=1 // pred_fallthru
      _
    // Predicated region
    $region26: #{tpu_custom_call.1} parent=1 // pred_check
      _
    $region27: #{tpu_custom_call.1} parent=1 // pred_check_branch
      %118 = sbr.rel (0) target = $region29
    $region28: #{tpu_custom_call.1} parent=1 // pred_region
      %s120 = ssub.s32 128, 128
      %121 = vsyncadd [#allocation5], %s120
      %s123 = sshll.u32 [#allocation8], 4
      %s124 = int_to_ptr.vmem [resolvable:$true] %s123
      %126 = dma.vmem_to_hbm [thread:$0]  %s124, 128, %s2, [#allocation5]
    $region29: #{tpu_custom_call.1} parent=1 // pred_fallthru
      _
    // Predicated region
    $region30: #{tpu_custom_call.1} parent=1 // pred_check
      _
    $region31: #{tpu_custom_call.1} parent=1 // pred_check_branch
      %128 = sbr.rel (0) target = $region33
    $region32: #{tpu_custom_call.1} parent=1 // pred_region
      %129 = dma.done [#allocation5], 128
    $region33: #{tpu_custom_call.1} parent=1 // pred_fallthru
      _
    %130 = vsyncpa [#allocation4], 1
    %131 = vsyncpa [#allocation7], 1
    %132 = vsyncpa [#allocation5], 1

</llo_original>
